<compile_context>
chip_gen: v7x
topology: tpu7x:2x2x1
jax: 0.10.0
libtpu: 0.0.40
codegen_flags: <defaults>
</compile_context>

<pallas_src>
import functools

import jax
import jax.numpy as jnp
from jax.experimental import pallas as pl
from jax.experimental.pallas import tpu as pltpu


def _round_up(n, m):
    return ((n + m - 1) // m) * m


def _critic_kernel(x_ref, w1_ref, b1_ref, w2_ref, b2_ref, w3_ref, b3_ref,
                   w4_ref, b4_ref, o_ref, *, compute_dtype):
    # Mirrors X.float(): MXU operands are cast to compute_dtype (bf16 by default) with
    # f32 accumulation; all elementwise work (bias add, ReLU, head) stays in f32.
    x = x_ref[...].astype(compute_dtype)
    h = jnp.dot(x, w1_ref[...], preferred_element_type=jnp.float32) + b1_ref[...]
    h = jnp.maximum(h, 0.0)
    h = jnp.dot(h.astype(compute_dtype), w2_ref[...],
                preferred_element_type=jnp.float32) + b2_ref[...]
    h = jnp.maximum(h, 0.0)
    h = jnp.dot(h.astype(compute_dtype), w3_ref[...],
                preferred_element_type=jnp.float32) + b3_ref[...]
    h = jnp.maximum(h, 0.0)
    # fc4 head (hid -> 1): VPU multiply + XLU lane reduce instead of an N=1 MXU matmul.
    head = jnp.sum(h * w4_ref[...], axis=-1, keepdims=True) + b4_ref[...]   # (bm, 1)
    o_ref[...] = head.astype(o_ref.dtype)


def prepare_params(params, compute_dtype=jnp.bfloat16):
    """One-time (hoisted out of the per-call jit) pad/cast of the parameters.

    hid is zero-padded to a multiple of 128 lanes (mathematically identical); the
    three MXU weight matrices are cast to compute_dtype, biases and the fc4 head row
    stay f32.  Pass compute_dtype=jnp.float32 for exact PyTorch f32 semantics.
    """
    w1, b1, w2, b2, w3, b3, w4, b4 = params
    in_dim, hid = w1.shape
    hid_p = _round_up(hid, 128)
    f32 = jnp.float32

    def pad2(a, r, c):
        a = jnp.asarray(a, f32)
        return jnp.pad(a, ((0, r - a.shape[0]), (0, c - a.shape[1])))

    w1p = pad2(w1, in_dim, hid_p).astype(compute_dtype)
    w2p = pad2(w2, hid_p, hid_p).astype(compute_dtype)
    w3p = pad2(w3, hid_p, hid_p).astype(compute_dtype)
    b1p = pad2(b1, 1, hid_p)
    b2p = pad2(b2, 1, hid_p)
    b3p = pad2(b3, 1, hid_p)
    w4p = pad2(jnp.asarray(w4, f32).T, 1, hid_p)      # (hid, 1) -> (1, hid_p), f32 head
    b4p = jnp.asarray(b4, f32).reshape(1, 1)
    return (w1p, b1p, w2p, b2p, w3p, b3p, w4p, b4p)


@functools.partial(jax.jit, static_argnames=("block_b", "single_buffer_weights"))
def critic_forward(x, prepared, *, block_b=1024, single_buffer_weights=True):
    """Critic forward. x: (B, input_dim), any float dtype. Returns (B, 1) f32."""
    w1p, b1p, w2p, b2p, w3p, b3p, w4p, b4p = prepared
    B, in_dim = x.shape
    if w1p.shape[0] != in_dim:
        raise ValueError("prepared params do not match input_dim")
    hid_p = w1p.shape[1]
    compute_dtype = w1p.dtype          # bf16 by default, f32 for the exact path

    # Batch tile: multiple of 16 (bf16 sublane packing of the activations).  When
    # B >= bm no padding/copy of x is needed (ragged last block, OOB rows masked on
    # store); when B < bm we pad at most bm-1 rows, which is negligible by definition.
    bm = _round_up(min(block_b, B), 16)
    if bm > B:
        x = jnp.pad(x, ((0, bm - B), (0, 0)))
    Bk = x.shape[0]
    grid = (pl.cdiv(Bk, bm),)

    def resident(shape):
        # Constant index_map -> fetched once and kept resident; single-buffer it so
        # it does not occupy 2x VMEM (matters on v7x's 64 MiB VMEM per core).
        if single_buffer_weights:
            return pl.BlockSpec(shape, lambda i: (0, 0), pipeline_mode=pl.Buffered(1))
        return pl.BlockSpec(shape, lambda i: (0, 0))

    in_specs = [
        pl.BlockSpec((bm, in_dim), lambda i: (i, 0)),    # x tile (K dim unpadded)
        resident((in_dim, hid_p)), resident((1, hid_p)),  # fc1
        resident((hid_p, hid_p)), resident((1, hid_p)),   # fc2
        resident((hid_p, hid_p)), resident((1, hid_p)),   # fc3
        resident((1, hid_p)), resident((1, 1)),            # fc4 row + bias
    ]
    # Compact output: 4 bytes/row HBM writeback, contiguous in HBM.
    out_specs = pl.BlockSpec((bm, 1), lambda i: (i, 0))

    # VMEM budget (per TensorCore): resident weights + double-buffered x/out tiles +
    # headroom for live f32 activations.  Cap at ~85% of the chip's per-core VMEM.
    x_item = jnp.dtype(x.dtype).itemsize
    w_item = jnp.dtype(compute_dtype).itemsize
    n_wbuf = 1 if single_buffer_weights else 2
    est = n_wbuf * (w_item * (in_dim * hid_p + 2 * hid_p * hid_p) + 4 * (4 * hid_p + 1))
    est += 2 * bm * in_dim * x_item
    est += 2 * bm * 4
    est += 4 * bm * hid_p * 4
    try:
        vmem_cap = int(pltpu.get_tpu_info().vmem_capacity_bytes)
    except Exception:
        vmem_cap = 64 * 1024 * 1024        # conservative (v7x) if the query is missing
    cap = max(int(0.85 * vmem_cap), 48 * 1024 * 1024)
    vmem_limit = int(min(max(2 * est, 32 * 1024 * 1024), cap))

    out = pl.pallas_call(
        functools.partial(_critic_kernel, compute_dtype=compute_dtype),
        out_shape=jax.ShapeDtypeStruct((Bk, 1), jnp.float32),
        grid_spec=pltpu.PrefetchScalarGridSpec(
            num_scalar_prefetch=0,
            grid=grid,
            in_specs=in_specs,
            out_specs=out_specs,
        ),
        compiler_params=pltpu.CompilerParams(
            dimension_semantics=("parallel",),
            vmem_limit_bytes=vmem_limit,
        ),
    )(x, w1p, b1p, w2p, b2p, w3p, b3p, w4p, b4p)
    return out if Bk == B else out[:B]


_SINGLE_BUFFER_OK = True


def run_critic(x, prepared, **kwargs):
    """Runs the kernel.  Falls back to default double-buffered resident weights only
    if this jax build rejects pipeline_mode=pl.Buffered(1); other errors propagate."""
    global _SINGLE_BUFFER_OK
    if _SINGLE_BUFFER_OK:
        try:
            return jax.block_until_ready(
                critic_forward(x, prepared, single_buffer_weights=True, **kwargs))
        except Exception as e:  # narrow: only swallow pipeline_mode/buffering rejects
            msg = str(e).lower()
            if ("pipeline_mode" in msg) or ("buffered" in msg) or ("buffer" in msg):
                _SINGLE_BUFFER_OK = False
            else:
                raise
    return jax.block_until_ready(
        critic_forward(x, prepared, single_buffer_weights=False, **kwargs))


def init_params(key, input_dim, hidden_dim):
    """PyTorch nn.Linear-style init (U(-1/sqrt(fan_in), 1/sqrt(fan_in))); weights are
    stored transposed, i.e. (in_dim, out_dim), so y = x @ W + b."""
    ks = jax.random.split(key, 8)

    def lin(kw, kb, fan_in, fan_out):
        bound = 1.0 / jnp.sqrt(fan_in)
        w = jax.random.uniform(kw, (fan_in, fan_out), jnp.float32, -bound, bound)
        b = jax.random.uniform(kb, (1, fan_out), jnp.float32, -bound, bound)
        return w, b

    w1, b1 = lin(ks[0], ks[1], input_dim, hidden_dim)
    w2, b2 = lin(ks[2], ks[3], hidden_dim, hidden_dim)
    w3, b3 = lin(ks[4], ks[5], hidden_dim, hidden_dim)
    w4, b4 = lin(ks[6], ks[7], hidden_dim, 1)
    return (w1, b1, w2, b2, w3, b3, w4, b4)


def _reference(x, params, compute_dtype=jnp.float32):
    """Pure-JAX reference mirroring the kernel's cast pattern.
    compute_dtype=float32 is the exact PyTorch semantics."""
    w1, b1, w2, b2, w3, b3, w4, b4 = params
    f32 = jnp.float32

    def mm(a, w):
        return jnp.dot(a.astype(compute_dtype), w.astype(compute_dtype),
                       preferred_element_type=f32)

    h = jnp.maximum(mm(x.astype(f32), w1) + b1, 0.0)
    h = jnp.maximum(mm(h, w2) + b2, 0.0)
    h = jnp.maximum(mm(h, w3) + b3, 0.0)
    return jnp.sum(h * w4.T.astype(f32), axis=-1, keepdims=True) + b4


if __name__ == "__main__":
    key = jax.random.PRNGKey(0)
    k_x1, k_p1, k_x2, k_p2 = jax.random.split(key, 4)

    # 1) Small shape consistent with the module (batch=2, input_dim=4, hidden=32).
    batch, input_dim, hidden_dim = 2, 4, 32
    x = jax.random.normal(k_x1, (batch, input_dim), jnp.float32)
    params = init_params(k_p1, input_dim, hidden_dim)

    prep_bf16 = prepare_params(params, jnp.bfloat16)       # default bf16 MXU operands
    out_bf16 = run_critic(x, prep_bf16)
    assert out_bf16.shape == (batch, 1), out_bf16.shape
    ref_bf16 = _reference(x, params, compute_dtype=jnp.bfloat16)
    assert jnp.allclose(out_bf16, ref_bf16, atol=1e-3, rtol=1e-3), (out_bf16, ref_bf16)

    prep_f32 = prepare_params(params, jnp.float32)          # exact-precision path
    out_f32 = run_critic(x, prep_f32)
    ref_f32 = _reference(x, params, compute_dtype=jnp.float32)
    assert jnp.allclose(out_f32, ref_f32, atol=1e-3, rtol=1e-3), (out_f32, ref_f32)

    # 2) Larger, non-aligned batch: exercises the zero-copy ragged last block (grid=2),
    #    the unpadded-K x spec, and the compact (bm, 1) output.
    batch2, in2, hid2 = 1037, 20, 96
    x2 = jax.random.normal(k_x2, (batch2, in2), jnp.float32)
    params2 = init_params(k_p2, in2, hid2)
    out2 = run_critic(x2, prepare_params(params2, jnp.bfloat16), block_b=1024)
    assert out2.shape == (batch2, 1), out2.shape
    ref2 = _reference(x2, params2, compute_dtype=jnp.bfloat16)
    assert jnp.allclose(out2, ref2, atol=1e-3, rtol=1e-3), float(
        jnp.max(jnp.abs(out2 - ref2)))

    print("KERNEL_OK")
</pallas_src>

<mosaic_0001>
module attributes {stable_mosaic.version = 11 : i64} {
  func.func @_critic_kernel(%arg0: i32, %arg1: memref<16x4xf32, #tpu.memory_space<vmem>>, %arg2: memref<4x128xbf16, #tpu.memory_space<vmem>>, %arg3: memref<1x128xf32, #tpu.memory_space<vmem>>, %arg4: memref<128x128xbf16, #tpu.memory_space<vmem>>, %arg5: memref<1x128xf32, #tpu.memory_space<vmem>>, %arg6: memref<128x128xbf16, #tpu.memory_space<vmem>>, %arg7: memref<1x128xf32, #tpu.memory_space<vmem>>, %arg8: memref<1x128xf32, #tpu.memory_space<vmem>>, %arg9: memref<1x1xf32, #tpu.memory_space<vmem>>, %arg10: memref<16x1xf32, #tpu.memory_space<vmem>>) attributes {dimension_semantics = [#tpu.dimension_semantics<parallel>], iteration_bounds = array<i64: 1>, scalar_prefetch = 0 : i64, scratch_operands = 0 : i64, tpu.core_type = #tpu.core_type<tc>, window_params = [{transform_indices = @transform_0, window_bounds = array<i64: 16, 4>}, {pipeline_mode = #tpu.pipeline_mode<synchronous>, transform_indices = @transform_1, window_bounds = array<i64: 4, 128>}, {pipeline_mode = #tpu.pipeline_mode<synchronous>, transform_indices = @transform_2, window_bounds = array<i64: 1, 128>}, {pipeline_mode = #tpu.pipeline_mode<synchronous>, transform_indices = @transform_3, window_bounds = array<i64: 128, 128>}, {pipeline_mode = #tpu.pipeline_mode<synchronous>, transform_indices = @transform_4, window_bounds = array<i64: 1, 128>}, {pipeline_mode = #tpu.pipeline_mode<synchronous>, transform_indices = @transform_5, window_bounds = array<i64: 128, 128>}, {pipeline_mode = #tpu.pipeline_mode<synchronous>, transform_indices = @transform_6, window_bounds = array<i64: 1, 128>}, {pipeline_mode = #tpu.pipeline_mode<synchronous>, transform_indices = @transform_7, window_bounds = array<i64: 1, 128>}, {pipeline_mode = #tpu.pipeline_mode<synchronous>, transform_indices = @transform_8, window_bounds = array<i64: 1, 1>}, {transform_indices = @transform_9, window_bounds = array<i64: 16, 1>}]} {
    %c0 = arith.constant 0 : index
    %c0_0 = arith.constant 0 : index
    %0 = vector.load %arg1[%c0, %c0_0] : memref<16x4xf32, #tpu.memory_space<vmem>>, vector<16x4xf32>
    %1 = arith.truncf %0 : vector<16x4xf32> to vector<16x4xbf16>
    %c0_1 = arith.constant 0 : index
    %c0_2 = arith.constant 0 : index
    %2 = vector.load %arg2[%c0_1, %c0_2] : memref<4x128xbf16, #tpu.memory_space<vmem>>, vector<4x128xbf16>
    %cst = arith.constant dense<0.000000e+00> : vector<16x128xf32>
    %3 = tpu.matmul %1, %2, %cst {dimension_numbers = #tpu.dot_dimension_numbers<[1], [0], [0], [1], [0, 0, 1, 1], [], []>} : vector<16x4xbf16>, vector<4x128xbf16>, vector<16x128xf32> -> vector<16x128xf32>
    %c0_3 = arith.constant 0 : index
    %c0_4 = arith.constant 0 : index
    %4 = vector.load %arg3[%c0_3, %c0_4] : memref<1x128xf32, #tpu.memory_space<vmem>>, vector<1x128xf32>
    %5 = vector.broadcast %4 : vector<1x128xf32> to vector<16x128xf32>
    %6 = arith.addf %3, %5 : vector<16x128xf32>
    %cst_5 = arith.constant 0.000000e+00 : f32
    %7 = vector.broadcast %cst_5 : f32 to vector<16x128xf32>
    %8 = arith.maximumf %6, %7 : vector<16x128xf32>
    %9 = arith.truncf %8 : vector<16x128xf32> to vector<16x128xbf16>
    %c0_6 = arith.constant 0 : index
    %c0_7 = arith.constant 0 : index
    %10 = vector.load %arg4[%c0_6, %c0_7] : memref<128x128xbf16, #tpu.memory_space<vmem>>, vector<128x128xbf16>
    %cst_8 = arith.constant dense<0.000000e+00> : vector<16x128xf32>
    %11 = tpu.matmul %9, %10, %cst_8 {dimension_numbers = #tpu.dot_dimension_numbers<[1], [0], [0], [1], [0, 0, 1, 1], [], []>} : vector<16x128xbf16>, vector<128x128xbf16>, vector<16x128xf32> -> vector<16x128xf32>
    %c0_9 = arith.constant 0 : index
    %c0_10 = arith.constant 0 : index
    %12 = vector.load %arg5[%c0_9, %c0_10] : memref<1x128xf32, #tpu.memory_space<vmem>>, vector<1x128xf32>
    %13 = vector.broadcast %12 : vector<1x128xf32> to vector<16x128xf32>
    %14 = arith.addf %11, %13 : vector<16x128xf32>
    %cst_11 = arith.constant 0.000000e+00 : f32
    %15 = vector.broadcast %cst_11 : f32 to vector<16x128xf32>
    %16 = arith.maximumf %14, %15 : vector<16x128xf32>
    %17 = arith.truncf %16 : vector<16x128xf32> to vector<16x128xbf16>
    %c0_12 = arith.constant 0 : index
    %c0_13 = arith.constant 0 : index
    %18 = vector.load %arg6[%c0_12, %c0_13] : memref<128x128xbf16, #tpu.memory_space<vmem>>, vector<128x128xbf16>
    %cst_14 = arith.constant dense<0.000000e+00> : vector<16x128xf32>
    %19 = tpu.matmul %17, %18, %cst_14 {dimension_numbers = #tpu.dot_dimension_numbers<[1], [0], [0], [1], [0, 0, 1, 1], [], []>} : vector<16x128xbf16>, vector<128x128xbf16>, vector<16x128xf32> -> vector<16x128xf32>
    %c0_15 = arith.constant 0 : index
    %c0_16 = arith.constant 0 : index
    %20 = vector.load %arg7[%c0_15, %c0_16] : memref<1x128xf32, #tpu.memory_space<vmem>>, vector<1x128xf32>
    %21 = vector.broadcast %20 : vector<1x128xf32> to vector<16x128xf32>
    %22 = arith.addf %19, %21 : vector<16x128xf32>
    %cst_17 = arith.constant 0.000000e+00 : f32
    %23 = vector.broadcast %cst_17 : f32 to vector<16x128xf32>
    %24 = arith.maximumf %22, %23 : vector<16x128xf32>
    %c0_18 = arith.constant 0 : index
    %c0_19 = arith.constant 0 : index
    %25 = vector.load %arg8[%c0_18, %c0_19] : memref<1x128xf32, #tpu.memory_space<vmem>>, vector<1x128xf32>
    %26 = vector.broadcast %25 : vector<1x128xf32> to vector<16x128xf32>
    %27 = arith.mulf %24, %26 : vector<16x128xf32>
    %cst_20 = arith.constant dense<0.000000e+00> : vector<16xf32>
    %28 = vector.multi_reduction <add>, %27, %cst_20 [1] : vector<16x128xf32> to vector<16xf32>
    %29 = vector.shape_cast %28 : vector<16xf32> to vector<16x1xf32>
    %c0_21 = arith.constant 0 : index
    %c0_22 = arith.constant 0 : index
    %30 = vector.load %arg9[%c0_21, %c0_22] : memref<1x1xf32, #tpu.memory_space<vmem>>, vector<1x1xf32>
    %31 = vector.broadcast %30 : vector<1x1xf32> to vector<16x1xf32>
    %32 = arith.addf %29, %31 : vector<16x1xf32>
    %c0_23 = arith.constant 0 : index
    %c0_24 = arith.constant 0 : index
    %33 = vector.load %arg10[%c0_23, %c0_24] : memref<16x1xf32, #tpu.memory_space<vmem>>, vector<16x1xf32>
    tpu.vector_store %arg10[%c0_23, %c0_24], %32 {strides = array<i32>} : memref<16x1xf32, #tpu.memory_space<vmem>>, vector<16x1xf32>,
    return
  }
  func.func @transform_0(%arg0: i32) -> (i32, i32) {
    %c0_i32 = arith.constant 0 : i32
    %c0_i32_0 = arith.constant 0 : i32
    return %arg0, %c0_i32 : i32, i32
  }
  func.func @transform_1(%arg0: i32) -> (i32, i32) {
    %c0_i32 = arith.constant 0 : i32
    %c0_i32_0 = arith.constant 0 : i32
    %c0_i32_1 = arith.constant 0 : i32
    return %c0_i32, %c0_i32_0 : i32, i32
  }
  func.func @transform_2(%arg0: i32) -> (i32, i32) {
    %c0_i32 = arith.constant 0 : i32
    %c0_i32_0 = arith.constant 0 : i32
    %c0_i32_1 = arith.constant 0 : i32
    return %c0_i32, %c0_i32_0 : i32, i32
  }
  func.func @transform_3(%arg0: i32) -> (i32, i32) {
    %c0_i32 = arith.constant 0 : i32
    %c0_i32_0 = arith.constant 0 : i32
    %c0_i32_1 = arith.constant 0 : i32
    return %c0_i32, %c0_i32_0 : i32, i32
  }
  func.func @transform_4(%arg0: i32) -> (i32, i32) {
    %c0_i32 = arith.constant 0 : i32
    %c0_i32_0 = arith.constant 0 : i32
    %c0_i32_1 = arith.constant 0 : i32
    return %c0_i32, %c0_i32_0 : i32, i32
  }
  func.func @transform_5(%arg0: i32) -> (i32, i32) {
    %c0_i32 = arith.constant 0 : i32
    %c0_i32_0 = arith.constant 0 : i32
    %c0_i32_1 = arith.constant 0 : i32
    return %c0_i32, %c0_i32_0 : i32, i32
  }
  func.func @transform_6(%arg0: i32) -> (i32, i32) {
    %c0_i32 = arith.constant 0 : i32
    %c0_i32_0 = arith.constant 0 : i32
    %c0_i32_1 = arith.constant 0 : i32
    return %c0_i32, %c0_i32_0 : i32, i32
  }
  func.func @transform_7(%arg0: i32) -> (i32, i32) {
    %c0_i32 = arith.constant 0 : i32
    %c0_i32_0 = arith.constant 0 : i32
    %c0_i32_1 = arith.constant 0 : i32
    return %c0_i32, %c0_i32_0 : i32, i32
  }
  func.func @transform_8(%arg0: i32) -> (i32, i32) {
    %c0_i32 = arith.constant 0 : i32
    %c0_i32_0 = arith.constant 0 : i32
    %c0_i32_1 = arith.constant 0 : i32
    return %c0_i32, %c0_i32_0 : i32, i32
  }
  func.func @transform_9(%arg0: i32) -> (i32, i32) {
    %c0_i32 = arith.constant 0 : i32
    %c0_i32_0 = arith.constant 0 : i32
    return %arg0, %c0_i32 : i32, i32
  }
}

</mosaic_0001>

<llo_original>
// kernel: critic_forward.1
$region0: #{critic_forward.1}
  #allocation0 [shape = 'u32[]', space=smem, size = 0x4, offset = 0x4, fixed_abs, tag = 'smem constant byte address 0x4 - core index']
  #allocation1 [shape = 'u32[144,128]{1,0:T(1,128)}', space=vmem, size = 0x12000, scoped, tag = 'internal scratch']
  #allocation2 [shape = 'f32[1,1]{1,0:T(1,128)S(1)}', space=vmem, size = 0x200, scoped, tag = 'scoped memory for critic_forward.1']
  %s0 = inlined_call_operand.vmem [shape: f32[16,4], index: 0, kind: input, shape index: {}]
  %s1 = inlined_call_operand.vmem [shape: bf16[4,128], index: 1, kind: input, shape index: {}]
  %s2 = inlined_call_operand.vmem [shape: f32[1,128], index: 2, kind: input, shape index: {}]
  %s3 = inlined_call_operand.hbm [shape: bf16[128,128], index: 3, kind: input, shape index: {}]
  %s4 = inlined_call_operand.vmem [shape: f32[1,128], index: 4, kind: input, shape index: {}]
  %s5 = inlined_call_operand.hbm [shape: bf16[128,128], index: 5, kind: input, shape index: {}]
  %s6 = inlined_call_operand.vmem [shape: f32[1,128], index: 6, kind: input, shape index: {}]
  %s7 = inlined_call_operand.vmem [shape: f32[1,128], index: 7, kind: input, shape index: {}]
  %s8 = inlined_call_operand.<no memory space> [shape: f32[1,1], index: 8, kind: input, shape index: {}]
  %s9 = inlined_call_operand.vmem [shape: f32[16,1], index: 9, kind: output, shape index: {}]
  %s10 = sld [smem:[#allocation0]]
  $region54: #{critic_forward.1} parent=0
    _
  %s12 = ssub.s32 1, %s10
  %s13 = scalar_select 0, %s12, %s10
  %v14 = vstv %s8
  %15 = vst [vmem:[#allocation2] sm:$0x1] %v14
  $region1: #{critic_forward.1} parent=0
    #allocation3 [shape = 'u8[32768]{0}', space=vmem, size = 0x8000, scoped, tag = 'input window, operand 3, single buffered']
    #allocation4 [shape = 's32[1]{0}', space=sflag, size = 0x4, scoped, tag = 'scoped memory for critic_forward.1']
    #allocation5 [shape = 'u8[32768]{0}', space=vmem, size = 0x8000, scoped, tag = 'input window, operand 5, single buffered']
    #allocation6 [shape = 's32[1]{0}', space=sflag, size = 0x4, scoped, tag = 'scoped memory for critic_forward.1']
    %16 = vsyncpa [#allocation4], 0
    %17 = vsyncpa [#allocation6], 0
    // Predicated region
    $region2: #{critic_forward.1} parent=1 // pred_check
      _
    $region3: #{critic_forward.1} parent=1 // pred_check_branch
      %19 = sbr.rel (0) target = $region5
    $region4: #{critic_forward.1} parent=1 // pred_region
      _
    $region5: #{critic_forward.1} parent=1 // pred_fallthru
      _
    // Predicated region
    $region6: #{critic_forward.1} parent=1 // pred_check
      _
    $region7: #{critic_forward.1} parent=1 // pred_check_branch
      %21 = sbr.rel (0) target = $region9
    $region8: #{critic_forward.1} parent=1 // pred_region
      _
    $region9: #{critic_forward.1} parent=1 // pred_fallthru
      _
    // Predicated region
    $region10: #{critic_forward.1} parent=1 // pred_check
      _
    $region11: #{critic_forward.1} parent=1 // pred_check_branch
      %23 = sbr.rel (0) target = $region13
    $region12: #{critic_forward.1} parent=1 // pred_region
      _
    $region13: #{critic_forward.1} parent=1 // pred_fallthru
      _
    // Predicated region
    $region14: #{critic_forward.1} parent=1 // pred_check
      _
    $region15: #{critic_forward.1} parent=1 // pred_check_branch
      %25 = sbr.rel (0) target = $region17
    $region16: #{critic_forward.1} parent=1 // pred_region
      %s27 = ssub.s32 1024, 1024
      %28 = vsyncadd [#allocation4], %s27
      %s29 = sshll.u32 [#allocation3], 4
      %s30 = int_to_ptr.vmem [resolvable:$true] %s29
      %35 = dma.hbm_to_vmem [thread:$0]  %s3, 1024, %s30, [#allocation4], 64, 64, 4
    $region17: #{critic_forward.1} parent=1 // pred_fallthru
      _
    // Predicated region
    $region18: #{critic_forward.1} parent=1 // pred_check
      _
    $region19: #{critic_forward.1} parent=1 // pred_check_branch
      %37 = sbr.rel (0) target = $region21
    $region20: #{critic_forward.1} parent=1 // pred_region
      _
    $region21: #{critic_forward.1} parent=1 // pred_fallthru
      _
    // Predicated region
    $region22: #{critic_forward.1} parent=1 // pred_check
      _
    $region23: #{critic_forward.1} parent=1 // pred_check_branch
      %39 = sbr.rel (0) target = $region25
    $region24: #{critic_forward.1} parent=1 // pred_region
      %s41 = ssub.s32 1024, 1024
      %42 = vsyncadd [#allocation6], %s41
      %s43 = sshll.u32 [#allocation5], 4
      %s44 = int_to_ptr.vmem [resolvable:$true] %s43
      %49 = dma.hbm_to_vmem [thread:$0]  %s5, 1024, %s44, [#allocation6], 64, 64, 4
    $region25: #{critic_forward.1} parent=1 // pred_fallthru
      _
    // Predicated region
    $region26: #{critic_forward.1} parent=1 // pred_check
      _
    $region27: #{critic_forward.1} parent=1 // pred_check_branch
      %51 = sbr.rel (0) target = $region29
    $region28: #{critic_forward.1} parent=1 // pred_region
      _
    $region29: #{critic_forward.1} parent=1 // pred_fallthru
      _
    // Predicated region
    $region30: #{critic_forward.1} parent=1 // pred_check
      _
    $region31: #{critic_forward.1} parent=1 // pred_check_branch
      %53 = sbr.rel (0) target = $region33
    $region32: #{critic_forward.1} parent=1 // pred_region
      _
    $region33: #{critic_forward.1} parent=1 // pred_fallthru
      _
    // Predicated region
    $region34: #{critic_forward.1} parent=1 // pred_check
      _
    $region35: #{critic_forward.1} parent=1 // pred_check_branch
      %55 = sbr.rel (0) target = $region37
    $region36: #{critic_forward.1} parent=1 // pred_region
      _
    $region37: #{critic_forward.1} parent=1 // pred_fallthru
      _
    // Predicated region
    $region38: #{critic_forward.1} parent=1 // pred_check
      _
    $region39: #{critic_forward.1} parent=1 // pred_check_branch
      %57 = sbr.rel (0) target = $region41
    $region40: #{critic_forward.1} parent=1 // pred_region
      %58 = dma.done [#allocation4], 1024
    $region41: #{critic_forward.1} parent=1 // pred_fallthru
      _
    // Predicated region
    $region42: #{critic_forward.1} parent=1 // pred_check
      _
    $region43: #{critic_forward.1} parent=1 // pred_check_branch
      %60 = sbr.rel (0) target = $region45
    $region44: #{critic_forward.1} parent=1 // pred_region
      %61 = dma.done [#allocation6], 1024
    $region45: #{critic_forward.1} parent=1 // pred_fallthru
      _
    %v63 = vld [vmem:[%s0] sm:$0xff]
    %v64 = vld [vmem:[%s0 + $0x8] sm:$0xff]
    %v65 = vpack.c.bf16 %v64, %v63
    %v66 = vld [vmem:[%s1] sm:$0x3]
    %v67 = vld [vmem:[%s2] sm:$0x1]
    %v69 = vlaneseq
    %v70 = vshrl.u32 %v69, 7
    %v71 = vsub.s32 0, %v70
    %v72 = vrot.slane %v67, %v71
    %vm74 = vcmask 31744
    %v76 = vsel %vm74, %v65, 0
    %vm78 = vcmask 1041408
    %v80 = vsel %vm78, %v66, 0
    %82 = vmatprep.subr.bf16.mxu0 0
    %83 = vmatpush1.bf16.msra.mxu0 %v80
    %84 = vmatprep.subr.bf16.mxu0 0
    %85 = vmatpush1.bf16.msra.mxu0 0
    %86 = vmatprep.subr.bf16.mxu0 0
    %87 = vmatpush1.bf16.msra.mxu0 0
    %88 = vmatprep.subr.bf16.mxu0 0
    %89 = vmatpush1.bf16.msra.mxu0 0
    %90 = vmatprep.subr.bf16.mxu0 0
    %91 = vmatpush1.bf16.msra.mxu0 0
    %92 = vmatprep.subr.bf16.mxu0 0
    %93 = vmatpush1.bf16.msra.mxu0 0
    %94 = vmatprep.subr.bf16.mxu0 0
    %95 = vmatpush1.bf16.msra.mxu0 0
    %96 = vmatprep.subr.bf16.mxu0 0
    %97 = vmatpush1.bf16.msra.mxu0 0
    %98 = vmatprep.subr.bf16.mxu0 0
    %99 = vmatpush1.bf16.msra.mxu0 0
    %100 = vmatprep.subr.bf16.mxu0 0
    %101 = vmatpush1.bf16.msra.mxu0 0
    %102 = vmatprep.subr.bf16.mxu0 0
    %103 = vmatpush1.bf16.msra.mxu0 0
    %104 = vmatprep.subr.bf16.mxu0 0
    %105 = vmatpush1.bf16.msra.mxu0 0
    %106 = vmatprep.subr.bf16.mxu0 0
    %107 = vmatpush1.bf16.msra.mxu0 0
    %108 = vmatprep.subr.bf16.mxu0 0
    %109 = vmatpush1.bf16.msra.mxu0 0
    %110 = vmatprep.subr.bf16.mxu0 0
    %111 = vmatpush1.bf16.msra.mxu0 0
    %112 = vmatprep.subr.bf16.mxu0 0
    %113 = vmatpush1.bf16.msra.mxu0 0
    %114 = vmatprep.mubr.bf16.mxu0 0
    %115 = vmatmul.mubr.bf16.gmra.mrb[0].mxu0 %v76
    %v116 = vpop.f32.mrb[0].mxu0
    %v117 = vadd.f32 %v72, %v116
    %v118 = vpop.f32.mrb[0].mxu0
    %v119 = vpop.f32.mrb[0].mxu0
    %v120 = vadd.f32 %v72, %v119
    %v121 = vpop.f32.mrb[0].mxu0
    %122 = vdwg.mxu0
    %v123 = vmax.f32 %v117, 0.0
    %v124 = vmax.f32 %v120, 0.0
    %v125 = vpack.c.bf16 %v124, %v123
    %v126 = vld [vmem:[#allocation3] sm:$0xf]
    %v127 = vld [vmem:[#allocation3 + $0x4] sm:$0xf]
    %v128 = vld [vmem:[#allocation3 + $0x8] sm:$0xf]
    %v129 = vld [vmem:[#allocation3 + $0xc] sm:$0xf]
    %v130 = vld [vmem:[#allocation3 + $0x10] sm:$0xf]
    %v131 = vld [vmem:[#allocation3 + $0x14] sm:$0xf]
    %v132 = vld [vmem:[#allocation3 + $0x18] sm:$0xf]
    %v133 = vld [vmem:[#allocation3 + $0x1c] sm:$0xf]
    %v134 = vld [vmem:[#allocation3 + $0x20] sm:$0xf]
    %v135 = vld [vmem:[#allocation3 + $0x24] sm:$0xf]
    %v136 = vld [vmem:[#allocation3 + $0x28] sm:$0xf]
    %v137 = vld [vmem:[#allocation3 + $0x2c] sm:$0xf]
    %v138 = vld [vmem:[#allocation3 + $0x30] sm:$0xf]
    %v139 = vld [vmem:[#allocation3 + $0x34] sm:$0xf]
    %v140 = vld [vmem:[#allocation3 + $0x38] sm:$0xf]
    %v141 = vld [vmem:[#allocation3 + $0x3c] sm:$0xf]
    %v142 = vld [vmem:[%s4] sm:$0x1]
    %v144 = vlaneseq
    %v145 = vshrl.u32 %v144, 7
    %v146 = vsub.s32 0, %v145
    %v147 = vrot.slane %v142, %v146
    %v165 = vunpack.c.l.b16 %v126
    %v166 = vunpack.c.l.b16 %v127
    %v167 = vunpack.c.l.b16 %v128
    %v168 = vunpack.c.l.b16 %v129
    %v169 = vunpack.c.l.b16 %v130
    %v170 = vunpack.c.l.b16 %v131
    %v171 = vunpack.c.l.b16 %v132
    %v172 = vunpack.c.l.b16 %v133
    %v173 = vunpack.c.l.b16 %v134
    %v174 = vunpack.c.l.b16 %v135
    %v175 = vunpack.c.l.b16 %v136
    %v176 = vunpack.c.l.b16 %v137
    %v177 = vunpack.c.l.b16 %v138
    %v178 = vunpack.c.l.b16 %v139
    %v179 = vunpack.c.l.b16 %v140
    %v180 = vunpack.c.l.b16 %v141
    %v181 = vpack.c.b16 %v166, %v165
    %v182 = vpack.c.b16 %v168, %v167
    %v183 = vpack.c.b16 %v170, %v169
    %v184 = vpack.c.b16 %v172, %v171
    %v185 = vpack.c.b16 %v174, %v173
    %v186 = vpack.c.b16 %v176, %v175
    %v187 = vpack.c.b16 %v178, %v177
    %v188 = vpack.c.b16 %v180, %v179
    %197 = vmatprep.subr.bf16.mxu0 0
    %198 = vmatpush1.bf16.msra.mxu0 %v181
    %199 = vmatprep.subr.bf16.mxu0 0
    %200 = vmatpush1.bf16.msra.mxu0 %v182
    %201 = vmatprep.subr.bf16.mxu0 0
    %202 = vmatpush1.bf16.msra.mxu0 %v183
    %203 = vmatprep.subr.bf16.mxu0 0
    %204 = vmatpush1.bf16.msra.mxu0 %v184
    %205 = vmatprep.subr.bf16.mxu0 0
    %206 = vmatpush1.bf16.msra.mxu0 %v185
    %207 = vmatprep.subr.bf16.mxu0 0
    %208 = vmatpush1.bf16.msra.mxu0 %v186
    %209 = vmatprep.subr.bf16.mxu0 0
    %210 = vmatpush1.bf16.msra.mxu0 %v187
    %211 = vmatprep.subr.bf16.mxu0 0
    %212 = vmatpush1.bf16.msra.mxu0 %v188
    %213 = vmatprep.subr.bf16.mxu0 0
    %214 = vmatpush1.bf16.msra.mxu0 0
    %215 = vmatprep.subr.bf16.mxu0 0
    %216 = vmatpush1.bf16.msra.mxu0 0
    %217 = vmatprep.subr.bf16.mxu0 0
    %218 = vmatpush1.bf16.msra.mxu0 0
    %219 = vmatprep.subr.bf16.mxu0 0
    %220 = vmatpush1.bf16.msra.mxu0 0
    %221 = vmatprep.subr.bf16.mxu0 0
    %222 = vmatpush1.bf16.msra.mxu0 0
    %223 = vmatprep.subr.bf16.mxu0 0
    %224 = vmatpush1.bf16.msra.mxu0 0
    %225 = vmatprep.subr.bf16.mxu0 0
    %226 = vmatpush1.bf16.msra.mxu0 0
    %227 = vmatprep.subr.bf16.mxu0 0
    %228 = vmatpush1.bf16.msra.mxu0 0
    %229 = vmatprep.mubr.bf16.mxu0 0
    %230 = vmatmul.mubr.bf16.gmra.mrb[0].mxu0 %v125
    %v231 = vpop.f32.mrb[0].mxu0
    %v232 = vadd.f32 %v147, %v231
    %v233 = vpop.f32.mrb[0].mxu0
    %v234 = vpop.f32.mrb[0].mxu0
    %v235 = vadd.f32 %v147, %v234
    %v236 = vpop.f32.mrb[0].mxu0
    %237 = vdwg.mxu0
    %v238 = vmax.f32 %v232, 0.0
    %v239 = vmax.f32 %v235, 0.0
    %v240 = vpack.c.bf16 %v239, %v238
    %v241 = vld [vmem:[#allocation5] sm:$0xf]
    %v242 = vld [vmem:[#allocation5 + $0x4] sm:$0xf]
    %v243 = vld [vmem:[#allocation5 + $0x8] sm:$0xf]
    %v244 = vld [vmem:[#allocation5 + $0xc] sm:$0xf]
    %v245 = vld [vmem:[#allocation5 + $0x10] sm:$0xf]
    %v246 = vld [vmem:[#allocation5 + $0x14] sm:$0xf]
    %v247 = vld [vmem:[#allocation5 + $0x18] sm:$0xf]
    %v248 = vld [vmem:[#allocation5 + $0x1c] sm:$0xf]
    %v249 = vld [vmem:[#allocation5 + $0x20] sm:$0xf]
    %v250 = vld [vmem:[#allocation5 + $0x24] sm:$0xf]
    %v251 = vld [vmem:[#allocation5 + $0x28] sm:$0xf]
    %v252 = vld [vmem:[#allocation5 + $0x2c] sm:$0xf]
    %v253 = vld [vmem:[#allocation5 + $0x30] sm:$0xf]
    %v254 = vld [vmem:[#allocation5 + $0x34] sm:$0xf]
    %v255 = vld [vmem:[#allocation5 + $0x38] sm:$0xf]
    %v256 = vld [vmem:[#allocation5 + $0x3c] sm:$0xf]
    %v257 = vld [vmem:[%s6] sm:$0x1]
    %v259 = vlaneseq
    %v260 = vshrl.u32 %v259, 7
    %v261 = vsub.s32 0, %v260
    %v262 = vrot.slane %v257, %v261
    %v280 = vunpack.c.l.b16 %v241
    %v281 = vunpack.c.l.b16 %v242
    %v282 = vunpack.c.l.b16 %v243
    %v283 = vunpack.c.l.b16 %v244
    %v284 = vunpack.c.l.b16 %v245
    %v285 = vunpack.c.l.b16 %v246
    %v286 = vunpack.c.l.b16 %v247
    %v287 = vunpack.c.l.b16 %v248
    %v288 = vunpack.c.l.b16 %v249
    %v289 = vunpack.c.l.b16 %v250
    %v290 = vunpack.c.l.b16 %v251
    %v291 = vunpack.c.l.b16 %v252
    %v292 = vunpack.c.l.b16 %v253
    %v293 = vunpack.c.l.b16 %v254
    %v294 = vunpack.c.l.b16 %v255
    %v295 = vunpack.c.l.b16 %v256
    %v296 = vpack.c.b16 %v281, %v280
    %v297 = vpack.c.b16 %v283, %v282
    %v298 = vpack.c.b16 %v285, %v284
    %v299 = vpack.c.b16 %v287, %v286
    %v300 = vpack.c.b16 %v289, %v288
    %v301 = vpack.c.b16 %v291, %v290
    %v302 = vpack.c.b16 %v293, %v292
    %v303 = vpack.c.b16 %v295, %v294
    %312 = vmatprep.subr.bf16.mxu0 0
    %313 = vmatpush1.bf16.msra.mxu0 %v296
    %314 = vmatprep.subr.bf16.mxu0 0
    %315 = vmatpush1.bf16.msra.mxu0 %v297
    %316 = vmatprep.subr.bf16.mxu0 0
    %317 = vmatpush1.bf16.msra.mxu0 %v298
    %318 = vmatprep.subr.bf16.mxu0 0
    %319 = vmatpush1.bf16.msra.mxu0 %v299
    %320 = vmatprep.subr.bf16.mxu0 0
    %321 = vmatpush1.bf16.msra.mxu0 %v300
    %322 = vmatprep.subr.bf16.mxu0 0
    %323 = vmatpush1.bf16.msra.mxu0 %v301
    %324 = vmatprep.subr.bf16.mxu0 0
    %325 = vmatpush1.bf16.msra.mxu0 %v302
    %326 = vmatprep.subr.bf16.mxu0 0
    %327 = vmatpush1.bf16.msra.mxu0 %v303
    %328 = vmatprep.subr.bf16.mxu0 0
    %329 = vmatpush1.bf16.msra.mxu0 0
    %330 = vmatprep.subr.bf16.mxu0 0
    %331 = vmatpush1.bf16.msra.mxu0 0
    %332 = vmatprep.subr.bf16.mxu0 0
    %333 = vmatpush1.bf16.msra.mxu0 0
    %334 = vmatprep.subr.bf16.mxu0 0
    %335 = vmatpush1.bf16.msra.mxu0 0
    %336 = vmatprep.subr.bf16.mxu0 0
    %337 = vmatpush1.bf16.msra.mxu0 0
    %338 = vmatprep.subr.bf16.mxu0 0
    %339 = vmatpush1.bf16.msra.mxu0 0
    %340 = vmatprep.subr.bf16.mxu0 0
    %341 = vmatpush1.bf16.msra.mxu0 0
    %342 = vmatprep.subr.bf16.mxu0 0
    %343 = vmatpush1.bf16.msra.mxu0 0
    %344 = vmatprep.mubr.bf16.mxu0 0
    %345 = vmatmul.mubr.bf16.gmra.mrb[0].mxu0 %v240
    %v346 = vpop.f32.mrb[0].mxu0
    %v347 = vadd.f32 %v262, %v346
    %v348 = vpop.f32.mrb[0].mxu0
    %v349 = vpop.f32.mrb[0].mxu0
    %v350 = vadd.f32 %v262, %v349
    %v351 = vpop.f32.mrb[0].mxu0
    %352 = vdwg.mxu0
    %v353 = vmax.f32 %v347, 0.0
    %v354 = vmax.f32 %v350, 0.0
    %v355 = vld [vmem:[%s7] sm:$0x1]
    %v357 = vlaneseq
    %v358 = vshrl.u32 %v357, 7
    %v359 = vsub.s32 0, %v358
    %v360 = vrot.slane %v355, %v359
    %v362 = vmul.f32 %v353, %v360
    %v363 = vmul.f32 %v354, %v360
    %364 = vadd.xlane.f32.xlu0 %v362
    %v365 = vpop.xlane.xlu0 %364
    %366 = vadd.xlane.f32.xlu0 %v363
    %v367 = vpop.xlane.xlu0 %366
    %v368 = vld [vmem:[#allocation2] sm:$0x1]
    %v370 = vlaneseq
    %v371 = vshrl.u32 %v370, 7
    %v372 = vsub.s32 0, %v371
    %v373 = vrot.slane %v368, %v372
    %v375 = vadd.f32 %v365, %v373
    %v376 = vadd.f32 %v367, %v373
    %vm377 = vcmask 7168
    %378 = vst.msk [vmem:[%s9] sm:$0xff] %vm377, %v375
    %379 = vst.msk [vmem:[%s9 + $0x8] sm:$0xff] %vm377, %v376
    // Predicated region
    $region46: #{critic_forward.1} parent=1 // pred_check
      _
    $region47: #{critic_forward.1} parent=1 // pred_check_branch
      %381 = sbr.rel (0) target = $region49
    $region48: #{critic_forward.1} parent=1 // pred_region
      _
    $region49: #{critic_forward.1} parent=1 // pred_fallthru
      _
    // Predicated region
    $region50: #{critic_forward.1} parent=1 // pred_check
      _
    $region51: #{critic_forward.1} parent=1 // pred_check_branch
      %383 = sbr.rel (0) target = $region53
    $region52: #{critic_forward.1} parent=1 // pred_region
      _
    $region53: #{critic_forward.1} parent=1 // pred_fallthru
      _
    %384 = vsyncpa [#allocation4], 1
    %385 = vsyncpa [#allocation6], 1

</llo_original>
